<compile_context>
chip_gen: v7x
topology: tpu7x:2x2x1
jax: 0.10.0
libtpu: 0.0.40
codegen_flags: <defaults>
</compile_context>

<pallas_src>
import functools

import jax
import jax.numpy as jnp
from jax.experimental import pallas as pl
from jax.experimental.pallas import tpu as pltpu


def _round_up(x, m):
    return (x + m - 1) // m * m


def cnn_text_kernel(x_ref, wconv_ref, bconv_ref, wfc_ref, bfc_ref,
                    out_ref, pooled_ref, *, ks, co):
    """Fused conv(all Ks) + bias/ReLU/max-over-time + FC for one batch tile."""
    TN, L, D = x_ref.shape

    # --- one lane-dense MXU matmul covering every branch & tap --------------
    x2d = x_ref[...].reshape(TN * L, D)                       # bf16 activations
    y = jnp.dot(x2d, wconv_ref[...],
                preferred_element_type=jnp.float32)           # (TN*L, ColsPad) f32
    y = y.reshape(TN, L, -1)

    # --- shift-and-add per branch, then max over time ------------------------
    pooled_ref[...] = jnp.zeros_like(pooled_ref)              # defined padding lanes
    col = 0
    for b, K in enumerate(ks):                                # static unroll
        lout = L - K + 1
        acc = y[:, 0:lout, col:col + co]
        for k in range(1, K):                                 # static tap shifts
            acc = acc + y[:, k:k + lout, col + k * co:col + (k + 1) * co]
        col += K * co
        pooled_ref[:, b * co:(b + 1) * co] = jnp.max(acc, axis=1)

    # bias + ReLU folded into the pooled epilogue (exactly equivalent to
    # relu(conv + b) followed by max over time).
    pooled = jnp.maximum(pooled_ref[...] + bconv_ref[...], 0.0)   # (TN, Fpad) f32

    # --- FC head (dropout == identity at inference) ---------------------------
    logits = jnp.dot(pooled, wfc_ref[...],
                     preferred_element_type=jnp.float32) + bfc_ref[...]
    out_ref[...] = logits.astype(out_ref.dtype)


def cnn_text_forward(tokens, params, ks, *, max_block_n=256,
                     vmem_working_set_bytes=16 * 1024 * 1024):
    """Embedding gather in plain JAX; conv + pool + FC in a single Pallas kernel."""
    # TODO(synk): fuse the embedding gather into the kernel (scalar-prefetch row
    # gather / manual DMA) to avoid the HBM round-trip of the gathered slab.
    emb = params["embed"][tokens]                             # (N, L, D) f32
    N, L = tokens.shape
    D = params["embed"].shape[1]
    Co = params["w3"].shape[0]
    C = params["wfc"].shape[1]
    nb = len(ks)

    # ---- host-side weight packing (free) ------------------------------------
    cols = sum(ks) * Co
    cols_pad = _round_up(cols, 128)                           # fused conv output width
    Fpad = _round_up(nb * Co, 128)                            # pooled feature width
    Cpad = _round_up(C, 128)                                  # logits width

    w_names = ("w3", "w4", "w5")
    b_names = ("b3", "b4", "b5")
    wcols = []
    for K, wn in zip(ks, w_names):
        w = params[wn]                                        # (Co, K, D)
        # columns [k*Co:(k+1)*Co] of this branch block = w[:, k, :].T
        wcols.append(jnp.transpose(w, (2, 1, 0)).reshape(D, K * Co))
    wconv = jnp.concatenate(wcols, axis=1)
    wconv = jnp.pad(wconv, ((0, 0), (0, cols_pad - cols))).astype(jnp.bfloat16)

    bconv = jnp.zeros((1, Fpad), jnp.float32)
    for b, bn in enumerate(b_names[:nb]):
        bconv = bconv.at[0, b * Co:(b + 1) * Co].set(params[bn][0])

    wfc = jnp.pad(params["wfc"], ((0, Fpad - nb * Co), (0, Cpad - C)))
    bfc = jnp.pad(params["bfc"], ((0, 0), (0, Cpad - C)))

    # ---- batch tile sized against a conservative VMEM working-set budget ----
    per_row = (2 * L * D * 2              # double-buffered bf16 x tile
               + L * D * 2                # flattened activation copy in-kernel
               + L * cols_pad * 4         # fused conv matmul output (f32)
               + Fpad * 4 + 2 * Cpad * 4)  # pooled scratch + double-buffered out
    tn = max(8, (vmem_working_set_bytes // max(per_row, 1)) // 8 * 8)
    tn = int(min(tn, max_block_n, _round_up(N, 8)))
    n_pad = _round_up(N, tn)

    x = emb.astype(jnp.bfloat16)                              # bf16 MXU operand
    if n_pad != N:
        x = jnp.pad(x, ((0, n_pad - N), (0, 0), (0, 0)))

    kernel = functools.partial(cnn_text_kernel, ks=tuple(ks), co=Co)
    out = pl.pallas_call(
        kernel,
        out_shape=jax.ShapeDtypeStruct((n_pad, Cpad), jnp.float32),
        grid=(n_pad // tn,),
        in_specs=[
            pl.BlockSpec((tn, L, D), lambda i: (i, 0, 0)),        # x streams per tile
            pl.BlockSpec((D, cols_pad), lambda i: (0, 0)),        # weights resident
            pl.BlockSpec((1, Fpad), lambda i: (0, 0)),
            pl.BlockSpec((Fpad, Cpad), lambda i: (0, 0)),
            pl.BlockSpec((1, Cpad), lambda i: (0, 0)),
        ],
        out_specs=pl.BlockSpec((tn, Cpad), lambda i: (i, 0)),     # lane-dense output
        scratch_shapes=[pltpu.VMEM((tn, Fpad), jnp.float32)],     # pooled features
        compiler_params=pltpu.CompilerParams(
            dimension_semantics=("parallel",)),
    )(x, wconv, bconv, wfc, bfc)
    return out[:N, :C]


def cnn_text_reference(tokens, params, ks):
    """Pure-JAX f32 reference mirroring the PyTorch forward."""
    emb = params["embed"][tokens]                             # (N, L, D)
    parts = []
    for K, wn, bn in zip(ks, ("w3", "w4", "w5"), ("b3", "b4", "b5")):
        w = params[wn]                                        # (Co, K, D)
        b = params[bn][0]                                     # (Co,)
        Lout = emb.shape[1] - K + 1
        conv = sum(jnp.einsum("nld,cd->nlc", emb[:, k:k + Lout, :], w[:, k, :])
                   for k in range(K)) + b
        parts.append(jnp.max(jax.nn.relu(conv), axis=1))
    pooled = jnp.concatenate(parts, axis=1)
    return pooled @ params["wfc"] + params["bfc"][0]


if __name__ == "__main__":
    # Small, module-consistent shapes.
    V = 50          # embed_num (vocab)
    D = 32          # embed_dim
    C = 4           # class_num
    Co = 8          # kernel_num
    Ks = (3, 4, 5)  # kernel_sizes
    N, L = 2, 16    # batch, sequence length

    key = jax.random.PRNGKey(0)
    k = jax.random.split(key, 10)
    params = {
        "embed": 0.1 * jax.random.normal(k[0], (V, D), jnp.float32),
        "w3":    0.1 * jax.random.normal(k[1], (Co, 3, D), jnp.float32),
        "b3":    0.1 * jax.random.normal(k[2], (1, Co), jnp.float32),
        "w4":    0.1 * jax.random.normal(k[3], (Co, 4, D), jnp.float32),
        "b4":    0.1 * jax.random.normal(k[4], (1, Co), jnp.float32),
        "w5":    0.1 * jax.random.normal(k[5], (Co, 5, D), jnp.float32),
        "b5":    0.1 * jax.random.normal(k[6], (1, Co), jnp.float32),
        "wfc":   0.1 * jax.random.normal(k[7], (len(Ks) * Co, C), jnp.float32),
        "bfc":   0.1 * jax.random.normal(k[8], (1, C), jnp.float32),
    }
    tokens = jax.random.randint(k[9], (N, L), 0, V)

    out = cnn_text_forward(tokens, params, Ks)
    jax.block_until_ready(out)

    ref = cnn_text_reference(tokens, params, Ks)
    assert out.shape == (N, C), out.shape
    # bf16 conv-matmul operands -> loosened tolerance vs the f32 reference.
    assert jnp.allclose(out, ref, rtol=2e-2, atol=2e-2), (out, ref)
    print("KERNEL_OK")
</pallas_src>

<mosaic_0001>
module attributes {stable_mosaic.version = 11 : i64} {
  func.func @cnn_text_kernel(%arg0: i32, %arg1: memref<8x16x32xbf16, #tpu.memory_space<vmem>>, %arg2: memref<32x128xbf16, #tpu.memory_space<vmem>>, %arg3: memref<1x128xf32, #tpu.memory_space<vmem>>, %arg4: memref<128x128xf32, #tpu.memory_space<vmem>>, %arg5: memref<1x128xf32, #tpu.memory_space<vmem>>, %arg6: memref<8x128xf32, #tpu.memory_space<vmem>>, %arg7: memref<8x128xf32, #tpu.memory_space<vmem>>) attributes {dimension_semantics = [#tpu.dimension_semantics<parallel>], iteration_bounds = array<i64: 1>, scalar_prefetch = 0 : i64, scratch_operands = 1 : i64, tpu.core_type = #tpu.core_type<tc>, window_params = [{transform_indices = @transform_0, window_bounds = array<i64: 8, 16, 32>}, {pipeline_mode = #tpu.pipeline_mode<synchronous>, transform_indices = @transform_1, window_bounds = array<i64: 32, 128>}, {pipeline_mode = #tpu.pipeline_mode<synchronous>, transform_indices = @transform_2, window_bounds = array<i64: 1, 128>}, {pipeline_mode = #tpu.pipeline_mode<synchronous>, transform_indices = @transform_3, window_bounds = array<i64: 128, 128>}, {pipeline_mode = #tpu.pipeline_mode<synchronous>, transform_indices = @transform_4, window_bounds = array<i64: 1, 128>}, {transform_indices = @transform_5, window_bounds = array<i64: 8, 128>}]} {
    %c0 = arith.constant 0 : index
    %c0_0 = arith.constant 0 : index
    %c0_1 = arith.constant 0 : index
    %0 = vector.load %arg1[%c0, %c0_0, %c0_1] : memref<8x16x32xbf16, #tpu.memory_space<vmem>>, vector<8x16x32xbf16>
    %1 = vector.shape_cast %0 : vector<8x16x32xbf16> to vector<128x32xbf16>
    %c0_2 = arith.constant 0 : index
    %c0_3 = arith.constant 0 : index
    %2 = vector.load %arg2[%c0_2, %c0_3] : memref<32x128xbf16, #tpu.memory_space<vmem>>, vector<32x128xbf16>
    %cst = arith.constant dense<0.000000e+00> : vector<128x128xf32>
    %3 = tpu.matmul %1, %2, %cst {dimension_numbers = #tpu.dot_dimension_numbers<[1], [0], [0], [1], [0, 0, 1, 1], [], []>} : vector<128x32xbf16>, vector<32x128xbf16>, vector<128x128xf32> -> vector<128x128xf32>
    %4 = vector.shape_cast %3 : vector<128x128xf32> to vector<8x16x128xf32>
    %cst_4 = arith.constant 0.000000e+00 : f32
    %5 = vector.broadcast %cst_4 : f32 to vector<8x128xf32>
    %c0_5 = arith.constant 0 : index
    %c0_6 = arith.constant 0 : index
    %6 = vector.load %arg7[%c0_5, %c0_6] : memref<8x128xf32, #tpu.memory_space<vmem>>, vector<8x128xf32>
    tpu.vector_store %arg7[%c0_5, %c0_6], %5 {strides = array<i32>} : memref<8x128xf32, #tpu.memory_space<vmem>>, vector<8x128xf32>,
    %7 = vector.extract_strided_slice %4 {offsets = [0, 0, 0], sizes = [8, 14, 8], strides = [1, 1, 1]} : vector<8x16x128xf32> to vector<8x14x8xf32>
    %8 = vector.extract_strided_slice %4 {offsets = [0, 1, 8], sizes = [8, 14, 8], strides = [1, 1, 1]} : vector<8x16x128xf32> to vector<8x14x8xf32>
    %9 = arith.addf %7, %8 : vector<8x14x8xf32>
    %10 = vector.extract_strided_slice %4 {offsets = [0, 2, 16], sizes = [8, 14, 8], strides = [1, 1, 1]} : vector<8x16x128xf32> to vector<8x14x8xf32>
    %11 = arith.addf %9, %10 : vector<8x14x8xf32>
    %cst_7 = arith.constant dense<0xFF800000> : vector<8x8xf32>
    %12 = vector.multi_reduction <maximumf>, %11, %cst_7 [1] : vector<8x14x8xf32> to vector<8x8xf32>
    %c0_8 = arith.constant 0 : index
    %c0_9 = arith.constant 0 : index
    %13 = vector.load %arg7[%c0_8, %c0_9] : memref<8x128xf32, #tpu.memory_space<vmem>>, vector<8x8xf32>
    tpu.vector_store %arg7[%c0_8, %c0_9], %12 {strides = array<i32>} : memref<8x128xf32, #tpu.memory_space<vmem>>, vector<8x8xf32>,
    %14 = vector.extract_strided_slice %4 {offsets = [0, 0, 24], sizes = [8, 13, 8], strides = [1, 1, 1]} : vector<8x16x128xf32> to vector<8x13x8xf32>
    %15 = vector.extract_strided_slice %4 {offsets = [0, 1, 32], sizes = [8, 13, 8], strides = [1, 1, 1]} : vector<8x16x128xf32> to vector<8x13x8xf32>
    %16 = arith.addf %14, %15 : vector<8x13x8xf32>
    %17 = vector.extract_strided_slice %4 {offsets = [0, 2, 40], sizes = [8, 13, 8], strides = [1, 1, 1]} : vector<8x16x128xf32> to vector<8x13x8xf32>
    %18 = arith.addf %16, %17 : vector<8x13x8xf32>
    %19 = vector.extract_strided_slice %4 {offsets = [0, 3, 48], sizes = [8, 13, 8], strides = [1, 1, 1]} : vector<8x16x128xf32> to vector<8x13x8xf32>
    %20 = arith.addf %18, %19 : vector<8x13x8xf32>
    %cst_10 = arith.constant dense<0xFF800000> : vector<8x8xf32>
    %21 = vector.multi_reduction <maximumf>, %20, %cst_10 [1] : vector<8x13x8xf32> to vector<8x8xf32>
    %c0_11 = arith.constant 0 : index
    %c8 = arith.constant 8 : index
    %22 = vector.load %arg7[%c0_11, %c8] : memref<8x128xf32, #tpu.memory_space<vmem>>, vector<8x8xf32>
    tpu.vector_store %arg7[%c0_11, %c8], %21 {strides = array<i32>} : memref<8x128xf32, #tpu.memory_space<vmem>>, vector<8x8xf32>,
    %23 = vector.extract_strided_slice %4 {offsets = [0, 0, 56], sizes = [8, 12, 8], strides = [1, 1, 1]} : vector<8x16x128xf32> to vector<8x12x8xf32>
    %24 = vector.extract_strided_slice %4 {offsets = [0, 1, 64], sizes = [8, 12, 8], strides = [1, 1, 1]} : vector<8x16x128xf32> to vector<8x12x8xf32>
    %25 = arith.addf %23, %24 : vector<8x12x8xf32>
    %26 = vector.extract_strided_slice %4 {offsets = [0, 2, 72], sizes = [8, 12, 8], strides = [1, 1, 1]} : vector<8x16x128xf32> to vector<8x12x8xf32>
    %27 = arith.addf %25, %26 : vector<8x12x8xf32>
    %28 = vector.extract_strided_slice %4 {offsets = [0, 3, 80], sizes = [8, 12, 8], strides = [1, 1, 1]} : vector<8x16x128xf32> to vector<8x12x8xf32>
    %29 = arith.addf %27, %28 : vector<8x12x8xf32>
    %30 = vector.extract_strided_slice %4 {offsets = [0, 4, 88], sizes = [8, 12, 8], strides = [1, 1, 1]} : vector<8x16x128xf32> to vector<8x12x8xf32>
    %31 = arith.addf %29, %30 : vector<8x12x8xf32>
    %cst_12 = arith.constant dense<0xFF800000> : vector<8x8xf32>
    %32 = vector.multi_reduction <maximumf>, %31, %cst_12 [1] : vector<8x12x8xf32> to vector<8x8xf32>
    %c0_13 = arith.constant 0 : index
    %c16 = arith.constant 16 : index
    %33 = vector.load %arg7[%c0_13, %c16] : memref<8x128xf32, #tpu.memory_space<vmem>>, vector<8x8xf32>
    tpu.vector_store %arg7[%c0_13, %c16], %32 {strides = array<i32>} : memref<8x128xf32, #tpu.memory_space<vmem>>, vector<8x8xf32>,
    %c0_14 = arith.constant 0 : index
    %c0_15 = arith.constant 0 : index
    %34 = vector.load %arg7[%c0_14, %c0_15] : memref<8x128xf32, #tpu.memory_space<vmem>>, vector<8x128xf32>
    %c0_16 = arith.constant 0 : index
    %c0_17 = arith.constant 0 : index
    %35 = vector.load %arg3[%c0_16, %c0_17] : memref<1x128xf32, #tpu.memory_space<vmem>>, vector<1x128xf32>
    %36 = vector.broadcast %35 : vector<1x128xf32> to vector<8x128xf32>
    %37 = arith.addf %34, %36 : vector<8x128xf32>
    %cst_18 = arith.constant 0.000000e+00 : f32
    %38 = vector.broadcast %cst_18 : f32 to vector<8x128xf32>
    %39 = arith.maximumf %37, %38 : vector<8x128xf32>
    %c0_19 = arith.constant 0 : index
    %c0_20 = arith.constant 0 : index
    %40 = vector.load %arg4[%c0_19, %c0_20] : memref<128x128xf32, #tpu.memory_space<vmem>>, vector<128x128xf32>
    %cst_21 = arith.constant dense<0.000000e+00> : vector<8x128xf32>
    %41 = tpu.matmul %39, %40, %cst_21 {dimension_numbers = #tpu.dot_dimension_numbers<[1], [0], [0], [1], [0, 0, 1, 1], [], []>} : vector<8x128xf32>, vector<128x128xf32>, vector<8x128xf32> -> vector<8x128xf32>
    %c0_22 = arith.constant 0 : index
    %c0_23 = arith.constant 0 : index
    %42 = vector.load %arg5[%c0_22, %c0_23] : memref<1x128xf32, #tpu.memory_space<vmem>>, vector<1x128xf32>
    %43 = vector.broadcast %42 : vector<1x128xf32> to vector<8x128xf32>
    %44 = arith.addf %41, %43 : vector<8x128xf32>
    %c0_24 = arith.constant 0 : index
    %c0_25 = arith.constant 0 : index
    %45 = vector.load %arg6[%c0_24, %c0_25] : memref<8x128xf32, #tpu.memory_space<vmem>>, vector<8x128xf32>
    tpu.vector_store %arg6[%c0_24, %c0_25], %44 {strides = array<i32>} : memref<8x128xf32, #tpu.memory_space<vmem>>, vector<8x128xf32>,
    return
  }
  func.func @transform_0(%arg0: i32) -> (i32, i32, i32) {
    %c0_i32 = arith.constant 0 : i32
    %c0_i32_0 = arith.constant 0 : i32
    %c0_i32_1 = arith.constant 0 : i32
    return %arg0, %c0_i32, %c0_i32_0 : i32, i32, i32
  }
  func.func @transform_1(%arg0: i32) -> (i32, i32) {
    %c0_i32 = arith.constant 0 : i32
    %c0_i32_0 = arith.constant 0 : i32
    %c0_i32_1 = arith.constant 0 : i32
    return %c0_i32, %c0_i32_0 : i32, i32
  }
  func.func @transform_2(%arg0: i32) -> (i32, i32) {
    %c0_i32 = arith.constant 0 : i32
    %c0_i32_0 = arith.constant 0 : i32
    %c0_i32_1 = arith.constant 0 : i32
    return %c0_i32, %c0_i32_0 : i32, i32
  }
  func.func @transform_3(%arg0: i32) -> (i32, i32) {
    %c0_i32 = arith.constant 0 : i32
    %c0_i32_0 = arith.constant 0 : i32
    %c0_i32_1 = arith.constant 0 : i32
    return %c0_i32, %c0_i32_0 : i32, i32
  }
  func.func @transform_4(%arg0: i32) -> (i32, i32) {
    %c0_i32 = arith.constant 0 : i32
    %c0_i32_0 = arith.constant 0 : i32
    %c0_i32_1 = arith.constant 0 : i32
    return %c0_i32, %c0_i32_0 : i32, i32
  }
  func.func @transform_5(%arg0: i32) -> (i32, i32) {
    %c0_i32 = arith.constant 0 : i32
    %c0_i32_0 = arith.constant 0 : i32
    return %arg0, %c0_i32 : i32, i32
  }
}

</mosaic_0001>

<llo_original>
// kernel: tpu_custom_call.1
$region0: #{tpu_custom_call.1}
  #allocation0 [shape = 'u32[]', space=smem, size = 0x4, offset = 0x4, fixed_abs, tag = 'smem constant byte address 0x4 - core index']
  #allocation1 [shape = 'u32[144,128]{1,0:T(1,128)}', space=vmem, size = 0x12000, scoped, tag = 'internal scratch']
  #allocation2 [shape = 'f32[8,128]{1,0:T(8,128)}', space=vmem, size = 0x1000, scoped, tag = 'scratch operand']
  %s0 = inlined_call_operand.hbm [shape: bf16[8,16,32], index: 0, kind: input, shape index: {}]
  %s1 = inlined_call_operand.hbm [shape: bf16[32,128], index: 1, kind: input, shape index: {}]
  %s2 = inlined_call_operand.vmem [shape: f32[1,128], index: 2, kind: input, shape index: {}]
  %s3 = inlined_call_operand.hbm [shape: f32[128,128], index: 3, kind: input, shape index: {}]
  %s4 = inlined_call_operand.vmem [shape: f32[1,128], index: 4, kind: input, shape index: {}]
  %s5 = inlined_call_operand.hbm [shape: f32[8,128], index: 5, kind: output, shape index: {}]
  %s6 = sld [smem:[#allocation0]]
  $region42: #{tpu_custom_call.1} parent=0
    _
  %s8 = ssub.s32 1, %s6
  %s9 = scalar_select 0, %s8, %s6
  $region1: #{tpu_custom_call.1} parent=0
    #allocation3 [shape = 'u8[32768]{0}', space=vmem, size = 0x8000, scoped, tag = 'input window, operand 0, single buffered']
    #allocation4 [shape = 's32[1]{0}', space=sflag, size = 0x4, scoped, tag = 'scoped memory for tpu_custom_call.1']
    #allocation5 [shape = 's32[1]{0}', space=sflag, size = 0x4, scoped, tag = 'scoped memory for tpu_custom_call.1']
    #allocation6 [shape = 'u8[8192]{0}', space=vmem, size = 0x2000, scoped, tag = 'input window, operand 1, single buffered']
    #allocation7 [shape = 's32[1]{0}', space=sflag, size = 0x4, scoped, tag = 'scoped memory for tpu_custom_call.1']
    #allocation8 [shape = 'u8[65536]{0}', space=vmem, size = 0x10000, scoped, tag = 'input window, operand 3, single buffered']
    #allocation9 [shape = 'u8[4096]{0}', space=vmem, size = 0x1000, scoped, tag = 'output window, operand 0, single buffered']
    %10 = vsyncpa [#allocation4], 0
    %11 = vsyncpa [#allocation7], 0
    %12 = vsyncpa [#allocation5], 0
    // Predicated region
    $region2: #{tpu_custom_call.1} parent=1 // pred_check
      _
    $region3: #{tpu_custom_call.1} parent=1 // pred_check_branch
      %14 = sbr.rel (0) target = $region5
    $region4: #{tpu_custom_call.1} parent=1 // pred_region
      %s16 = ssub.s32 1024, 1024
      %17 = vsyncadd [#allocation4], %s16
      %s18 = sshll.u32 [#allocation3], 4
      %s19 = int_to_ptr.vmem [resolvable:$true] %s18
      %24 = dma.hbm_to_vmem [thread:$0]  %s0, 1024, %s19, [#allocation4], 64, 64, 4
    $region5: #{tpu_custom_call.1} parent=1 // pred_fallthru
      _
    // Predicated region
    $region6: #{tpu_custom_call.1} parent=1 // pred_check
      _
    $region7: #{tpu_custom_call.1} parent=1 // pred_check_branch
      %26 = sbr.rel (0) target = $region9
    $region8: #{tpu_custom_call.1} parent=1 // pred_region
      %s28 = ssub.s32 256, 256
      %29 = vsyncadd [#allocation7], %s28
      %s30 = sshll.u32 [#allocation6], 4
      %s31 = int_to_ptr.vmem [resolvable:$true] %s30
      %36 = dma.hbm_to_vmem [thread:$0]  %s1, 256, %s31, [#allocation7], 64, 64, 4
    $region9: #{tpu_custom_call.1} parent=1 // pred_fallthru
      _
    // Predicated region
    $region10: #{tpu_custom_call.1} parent=1 // pred_check
      _
    $region11: #{tpu_custom_call.1} parent=1 // pred_check_branch
      %38 = sbr.rel (0) target = $region13
    $region12: #{tpu_custom_call.1} parent=1 // pred_region
      _
    $region13: #{tpu_custom_call.1} parent=1 // pred_fallthru
      _
    // Predicated region
    $region14: #{tpu_custom_call.1} parent=1 // pred_check
      _
    $region15: #{tpu_custom_call.1} parent=1 // pred_check_branch
      %40 = sbr.rel (0) target = $region17
    $region16: #{tpu_custom_call.1} parent=1 // pred_region
      %s42 = ssub.s32 2048, 2048
      %43 = vsyncadd [#allocation7], %s42
      %s44 = sshll.u32 [#allocation8], 4
      %s45 = int_to_ptr.vmem [resolvable:$true] %s44
      %50 = dma.hbm_to_vmem [thread:$0]  %s3, 2048, %s45, [#allocation7], 128, 128, 8
    $region17: #{tpu_custom_call.1} parent=1 // pred_fallthru
      _
    // Predicated region
    $region18: #{tpu_custom_call.1} parent=1 // pred_check
      _
    $region19: #{tpu_custom_call.1} parent=1 // pred_check_branch
      %52 = sbr.rel (0) target = $region21
    $region20: #{tpu_custom_call.1} parent=1 // pred_region
      _
    $region21: #{tpu_custom_call.1} parent=1 // pred_fallthru
      _
    // Predicated region
    $region22: #{tpu_custom_call.1} parent=1 // pred_check
      _
    $region23: #{tpu_custom_call.1} parent=1 // pred_check_branch
      %54 = sbr.rel (0) target = $region25
    $region24: #{tpu_custom_call.1} parent=1 // pred_region
      %55 = dma.done [#allocation4], 1024
    $region25: #{tpu_custom_call.1} parent=1 // pred_fallthru
      _
    // Predicated region
    $region26: #{tpu_custom_call.1} parent=1 // pred_check
      _
    $region27: #{tpu_custom_call.1} parent=1 // pred_check_branch
      %57 = sbr.rel (0) target = $region29
    $region28: #{tpu_custom_call.1} parent=1 // pred_region
      %58 = dma.done [#allocation7], 256
    $region29: #{tpu_custom_call.1} parent=1 // pred_fallthru
      _
    // Predicated region
    $region30: #{tpu_custom_call.1} parent=1 // pred_check
      _
    $region31: #{tpu_custom_call.1} parent=1 // pred_check_branch
      %60 = sbr.rel (0) target = $region33
    $region32: #{tpu_custom_call.1} parent=1 // pred_region
      %61 = dma.done [#allocation7], 2048
    $region33: #{tpu_custom_call.1} parent=1 // pred_fallthru
      _
    %v63 = vld [vmem:[#allocation3] sm:$0xf]
    %v64 = vld [vmem:[#allocation3 + $0x4] sm:$0xf]
    %v65 = vld [vmem:[#allocation3 + $0x8] sm:$0xf]
    %v66 = vld [vmem:[#allocation3 + $0xc] sm:$0xf]
    %v67 = vld [vmem:[#allocation3 + $0x10] sm:$0xf]
    %v68 = vld [vmem:[#allocation3 + $0x14] sm:$0xf]
    %v69 = vld [vmem:[#allocation3 + $0x18] sm:$0xf]
    %v70 = vld [vmem:[#allocation3 + $0x1c] sm:$0xf]
    %v71 = vld [vmem:[#allocation3 + $0x20] sm:$0xf]
    %v72 = vld [vmem:[#allocation3 + $0x24] sm:$0xf]
    %v73 = vld [vmem:[#allocation3 + $0x28] sm:$0xf]
    %v74 = vld [vmem:[#allocation3 + $0x2c] sm:$0xf]
    %v75 = vld [vmem:[#allocation3 + $0x30] sm:$0xf]
    %v76 = vld [vmem:[#allocation3 + $0x34] sm:$0xf]
    %v77 = vld [vmem:[#allocation3 + $0x38] sm:$0xf]
    %v78 = vld [vmem:[#allocation3 + $0x3c] sm:$0xf]
    %v79 = vld [vmem:[#allocation6] sm:$0xf]
    %v80 = vld [vmem:[#allocation6 + $0x4] sm:$0xf]
    %v81 = vld [vmem:[#allocation6 + $0x8] sm:$0xf]
    %v82 = vld [vmem:[#allocation6 + $0xc] sm:$0xf]
    %v99 = vunpack.c.l.b16 %v63
    %v100 = vunpack.c.l.b16 %v64
    %v101 = vunpack.c.l.b16 %v65
    %v102 = vunpack.c.l.b16 %v66
    %v103 = vunpack.c.l.b16 %v67
    %v104 = vunpack.c.l.b16 %v68
    %v105 = vunpack.c.l.b16 %v69
    %v106 = vunpack.c.l.b16 %v70
    %v107 = vunpack.c.l.b16 %v71
    %v108 = vunpack.c.l.b16 %v72
    %v109 = vunpack.c.l.b16 %v73
    %v110 = vunpack.c.l.b16 %v74
    %v111 = vunpack.c.l.b16 %v75
    %v112 = vunpack.c.l.b16 %v76
    %v113 = vunpack.c.l.b16 %v77
    %v114 = vunpack.c.l.b16 %v78
    %v115 = vpack.c.b16 %v100, %v99
    %v116 = vpack.c.b16 %v102, %v101
    %v117 = vpack.c.b16 %v104, %v103
    %v118 = vpack.c.b16 %v106, %v105
    %v119 = vpack.c.b16 %v108, %v107
    %v120 = vpack.c.b16 %v110, %v109
    %v121 = vpack.c.b16 %v112, %v111
    %v122 = vpack.c.b16 %v114, %v113
    %v127 = vunpack.c.l.b16 %v79
    %v128 = vunpack.c.l.b16 %v80
    %v129 = vunpack.c.l.b16 %v81
    %v130 = vunpack.c.l.b16 %v82
    %v131 = vpack.c.b16 %v128, %v127
    %v132 = vpack.c.b16 %v130, %v129
    %vm135 = vcmask 261120
    %v137 = vsel %vm135, %v115, 0
    %v140 = vsel %vm135, %v116, 0
    %v143 = vsel %vm135, %v117, 0
    %v146 = vsel %vm135, %v118, 0
    %v149 = vsel %vm135, %v119, 0
    %v152 = vsel %vm135, %v120, 0
    %v155 = vsel %vm135, %v121, 0
    %v158 = vsel %vm135, %v122, 0
    %160 = vmatprep.subr.bf16.mxu0 0
    %161 = vmatpush1.bf16.msra.mxu0 %v131
    %162 = vmatprep.subr.bf16.mxu0 0
    %163 = vmatpush1.bf16.msra.mxu0 %v132
    %164 = vmatprep.subr.bf16.mxu0 0
    %165 = vmatpush1.bf16.msra.mxu0 0
    %166 = vmatprep.subr.bf16.mxu0 0
    %167 = vmatpush1.bf16.msra.mxu0 0
    %168 = vmatprep.subr.bf16.mxu0 0
    %169 = vmatpush1.bf16.msra.mxu0 0
    %170 = vmatprep.subr.bf16.mxu0 0
    %171 = vmatpush1.bf16.msra.mxu0 0
    %172 = vmatprep.subr.bf16.mxu0 0
    %173 = vmatpush1.bf16.msra.mxu0 0
    %174 = vmatprep.subr.bf16.mxu0 0
    %175 = vmatpush1.bf16.msra.mxu0 0
    %176 = vmatprep.subr.bf16.mxu0 0
    %177 = vmatpush1.bf16.msra.mxu0 0
    %178 = vmatprep.subr.bf16.mxu0 0
    %179 = vmatpush1.bf16.msra.mxu0 0
    %180 = vmatprep.subr.bf16.mxu0 0
    %181 = vmatpush1.bf16.msra.mxu0 0
    %182 = vmatprep.subr.bf16.mxu0 0
    %183 = vmatpush1.bf16.msra.mxu0 0
    %184 = vmatprep.subr.bf16.mxu0 0
    %185 = vmatpush1.bf16.msra.mxu0 0
    %186 = vmatprep.subr.bf16.mxu0 0
    %187 = vmatpush1.bf16.msra.mxu0 0
    %188 = vmatprep.subr.bf16.mxu0 0
    %189 = vmatpush1.bf16.msra.mxu0 0
    %190 = vmatprep.subr.bf16.mxu0 0
    %191 = vmatpush1.bf16.msra.mxu0 0
    %192 = vmatprep.mubr.bf16.mxu0 0
    %193 = vmatmul.mubr.bf16.gmra.mrb[0].mxu0 %v137
    %v194 = vpop.f32.mrb[0].mxu0
    %v195 = vadd.f32 0.0, %v194
    %v196 = vpop.f32.mrb[0].mxu0
    %v197 = vpop.f32.mrb[0].mxu0
    %v198 = vadd.f32 0.0, %v197
    %v199 = vpop.f32.mrb[0].mxu0
    %200 = vmatprep.mubr.bf16.mxu0 0
    %201 = vmatmul.mubr.bf16.gmra.mrb[0].mxu0 %v140
    %v202 = vpop.f32.mrb[0].mxu0
    %v203 = vadd.f32 0.0, %v202
    %v204 = vpop.f32.mrb[0].mxu0
    %v205 = vpop.f32.mrb[0].mxu0
    %v206 = vadd.f32 0.0, %v205
    %v207 = vpop.f32.mrb[0].mxu0
    %208 = vmatprep.mubr.bf16.mxu0 0
    %209 = vmatmul.mubr.bf16.gmra.mrb[0].mxu0 %v143
    %v210 = vpop.f32.mrb[0].mxu0
    %v211 = vadd.f32 0.0, %v210
    %v212 = vpop.f32.mrb[0].mxu0
    %v213 = vpop.f32.mrb[0].mxu0
    %v214 = vadd.f32 0.0, %v213
    %v215 = vpop.f32.mrb[0].mxu0
    %216 = vmatprep.mubr.bf16.mxu0 0
    %217 = vmatmul.mubr.bf16.gmra.mrb[0].mxu0 %v146
    %v218 = vpop.f32.mrb[0].mxu0
    %v219 = vadd.f32 0.0, %v218
    %v220 = vpop.f32.mrb[0].mxu0
    %v221 = vpop.f32.mrb[0].mxu0
    %v222 = vadd.f32 0.0, %v221
    %v223 = vpop.f32.mrb[0].mxu0
    %224 = vmatprep.mubr.bf16.mxu0 0
    %225 = vmatmul.mubr.bf16.gmra.mrb[0].mxu0 %v149
    %v226 = vpop.f32.mrb[0].mxu0
    %v227 = vadd.f32 0.0, %v226
    %v228 = vpop.f32.mrb[0].mxu0
    %v229 = vpop.f32.mrb[0].mxu0
    %v230 = vadd.f32 0.0, %v229
    %v231 = vpop.f32.mrb[0].mxu0
    %232 = vmatprep.mubr.bf16.mxu0 0
    %233 = vmatmul.mubr.bf16.gmra.mrb[0].mxu0 %v152
    %v234 = vpop.f32.mrb[0].mxu0
    %v235 = vadd.f32 0.0, %v234
    %v236 = vpop.f32.mrb[0].mxu0
    %v237 = vpop.f32.mrb[0].mxu0
    %v238 = vadd.f32 0.0, %v237
    %v239 = vpop.f32.mrb[0].mxu0
    %240 = vmatprep.mubr.bf16.mxu0 0
    %241 = vmatmul.mubr.bf16.gmra.mrb[0].mxu0 %v155
    %v242 = vpop.f32.mrb[0].mxu0
    %v243 = vadd.f32 0.0, %v242
    %v244 = vpop.f32.mrb[0].mxu0
    %v245 = vpop.f32.mrb[0].mxu0
    %v246 = vadd.f32 0.0, %v245
    %v247 = vpop.f32.mrb[0].mxu0
    %248 = vmatprep.mubr.bf16.mxu0 0
    %249 = vmatmul.mubr.bf16.gmra.mrb[0].mxu0 %v158
    %v250 = vpop.f32.mrb[0].mxu0
    %v251 = vadd.f32 0.0, %v250
    %v252 = vpop.f32.mrb[0].mxu0
    %v253 = vpop.f32.mrb[0].mxu0
    %v254 = vadd.f32 0.0, %v253
    %v255 = vpop.f32.mrb[0].mxu0
    %256 = vdwg.mxu0
    %257 = vst [vmem:[#allocation2] sm:$0xff] 0.0
    %vm274 = vcmask 1046528
    %v275 = vrot.slane %v195, 1
    %v276 = vrot.slane %v198, 1
    %v277 = vsel %vm274, %v275, %v276
    %v278 = vrot.slane %v203, 1
    %v279 = vrot.slane %v206, 1
    %v280 = vsel %vm274, %v278, %v279
    %v281 = vrot.slane %v211, 1
    %v282 = vrot.slane %v214, 1
    %v283 = vsel %vm274, %v281, %v282
    %v284 = vrot.slane %v219, 1
    %v285 = vrot.slane %v222, 1
    %v286 = vsel %vm274, %v284, %v285
    %v287 = vrot.slane %v227, 1
    %v288 = vrot.slane %v230, 1
    %v289 = vsel %vm274, %v287, %v288
    %v290 = vrot.slane %v235, 1
    %v291 = vrot.slane %v238, 1
    %v292 = vsel %vm274, %v290, %v291
    %v293 = vrot.slane %v243, 1
    %v294 = vrot.slane %v246, 1
    %v295 = vsel %vm274, %v293, %v294
    %v296 = vrot.slane %v251, 1
    %v297 = vrot.slane %v254, 1
    %v298 = vsel %vm274, %v296, %v297
    %299 = vrot.lane.b32.xlu0 %v277, 120
    %v300 = vpop.permute.xlu0 %299
    %301 = vrot.lane.b32.xlu0 %v276, 120
    %v302 = vpop.permute.xlu0 %301
    %303 = vrot.lane.b32.xlu0 %v280, 120
    %v304 = vpop.permute.xlu0 %303
    %305 = vrot.lane.b32.xlu0 %v279, 120
    %v306 = vpop.permute.xlu0 %305
    %307 = vrot.lane.b32.xlu0 %v283, 120
    %v308 = vpop.permute.xlu0 %307
    %309 = vrot.lane.b32.xlu0 %v282, 120
    %v310 = vpop.permute.xlu0 %309
    %311 = vrot.lane.b32.xlu0 %v286, 120
    %v312 = vpop.permute.xlu0 %311
    %313 = vrot.lane.b32.xlu0 %v285, 120
    %v314 = vpop.permute.xlu0 %313
    %315 = vrot.lane.b32.xlu0 %v289, 120
    %v316 = vpop.permute.xlu0 %315
    %317 = vrot.lane.b32.xlu0 %v288, 120
    %v318 = vpop.permute.xlu0 %317
    %319 = vrot.lane.b32.xlu0 %v292, 120
    %v320 = vpop.permute.xlu0 %319
    %321 = vrot.lane.b32.xlu0 %v291, 120
    %v322 = vpop.permute.xlu0 %321
    %323 = vrot.lane.b32.xlu0 %v295, 120
    %v324 = vpop.permute.xlu0 %323
    %325 = vrot.lane.b32.xlu0 %v294, 120
    %v326 = vpop.permute.xlu0 %325
    %327 = vrot.lane.b32.xlu0 %v298, 120
    %v328 = vpop.permute.xlu0 %327
    %329 = vrot.lane.b32.xlu0 %v297, 120
    %v330 = vpop.permute.xlu0 %329
    %v347 = vadd.f32 %v195, %v300
    %v348 = vadd.f32 %v198, %v302
    %v349 = vadd.f32 %v203, %v304
    %v350 = vadd.f32 %v206, %v306
    %v351 = vadd.f32 %v211, %v308
    %v352 = vadd.f32 %v214, %v310
    %v353 = vadd.f32 %v219, %v312
    %v354 = vadd.f32 %v222, %v314
    %v355 = vadd.f32 %v227, %v316
    %v356 = vadd.f32 %v230, %v318
    %v357 = vadd.f32 %v235, %v320
    %v358 = vadd.f32 %v238, %v322
    %v359 = vadd.f32 %v243, %v324
    %v360 = vadd.f32 %v246, %v326
    %v361 = vadd.f32 %v251, %v328
    %v362 = vadd.f32 %v254, %v330
    %vm363 = vcmask 1045504
    %v364 = vrot.slane %v195, 2
    %v365 = vrot.slane %v198, 2
    %v366 = vsel %vm363, %v364, %v365
    %v367 = vrot.slane %v203, 2
    %v368 = vrot.slane %v206, 2
    %v369 = vsel %vm363, %v367, %v368
    %v370 = vrot.slane %v211, 2
    %v371 = vrot.slane %v214, 2
    %v372 = vsel %vm363, %v370, %v371
    %v373 = vrot.slane %v219, 2
    %v374 = vrot.slane %v222, 2
    %v375 = vsel %vm363, %v373, %v374
    %v376 = vrot.slane %v227, 2
    %v377 = vrot.slane %v230, 2
    %v378 = vsel %vm363, %v376, %v377
    %v379 = vrot.slane %v235, 2
    %v380 = vrot.slane %v238, 2
    %v381 = vsel %vm363, %v379, %v380
    %v382 = vrot.slane %v243, 2
    %v383 = vrot.slane %v246, 2
    %v384 = vsel %vm363, %v382, %v383
    %v385 = vrot.slane %v251, 2
    %v386 = vrot.slane %v254, 2
    %v387 = vsel %vm363, %v385, %v386
    %388 = vrot.lane.b32.xlu0 %v366, 112
    %v389 = vpop.permute.xlu0 %388
    %390 = vrot.lane.b32.xlu0 %v365, 112
    %v391 = vpop.permute.xlu0 %390
    %392 = vrot.lane.b32.xlu0 %v369, 112
    %v393 = vpop.permute.xlu0 %392
    %394 = vrot.lane.b32.xlu0 %v368, 112
    %v395 = vpop.permute.xlu0 %394
    %396 = vrot.lane.b32.xlu0 %v372, 112
    %v397 = vpop.permute.xlu0 %396
    %398 = vrot.lane.b32.xlu0 %v371, 112
    %v399 = vpop.permute.xlu0 %398
    %400 = vrot.lane.b32.xlu0 %v375, 112
    %v401 = vpop.permute.xlu0 %400
    %402 = vrot.lane.b32.xlu0 %v374, 112
    %v403 = vpop.permute.xlu0 %402
    %404 = vrot.lane.b32.xlu0 %v378, 112
    %v405 = vpop.permute.xlu0 %404
    %406 = vrot.lane.b32.xlu0 %v377, 112
    %v407 = vpop.permute.xlu0 %406
    %408 = vrot.lane.b32.xlu0 %v381, 112
    %v409 = vpop.permute.xlu0 %408
    %410 = vrot.lane.b32.xlu0 %v380, 112
    %v411 = vpop.permute.xlu0 %410
    %412 = vrot.lane.b32.xlu0 %v384, 112
    %v413 = vpop.permute.xlu0 %412
    %414 = vrot.lane.b32.xlu0 %v383, 112
    %v415 = vpop.permute.xlu0 %414
    %416 = vrot.lane.b32.xlu0 %v387, 112
    %v417 = vpop.permute.xlu0 %416
    %418 = vrot.lane.b32.xlu0 %v386, 112
    %v419 = vpop.permute.xlu0 %418
    %v436 = vadd.f32 %v347, %v389
    %v437 = vadd.f32 %v348, %v391
    %v438 = vadd.f32 %v349, %v393
    %v439 = vadd.f32 %v350, %v395
    %v440 = vadd.f32 %v351, %v397
    %v441 = vadd.f32 %v352, %v399
    %v442 = vadd.f32 %v353, %v401
    %v443 = vadd.f32 %v354, %v403
    %v444 = vadd.f32 %v355, %v405
    %v445 = vadd.f32 %v356, %v407
    %v446 = vadd.f32 %v357, %v409
    %v447 = vadd.f32 %v358, %v411
    %v448 = vadd.f32 %v359, %v413
    %v449 = vadd.f32 %v360, %v415
    %v450 = vadd.f32 %v361, %v417
    %v451 = vadd.f32 %v362, %v419
    %vm452 = vcmask 64512
    %v453 = vsel %vm452, %v436, -inf
    %vm454 = vcmask 62464
    %v455 = vsel %vm454, %v437, -inf
    %v456 = vmax.f32 %v453, %v455
    %v457 = vrot.slane %v456, 4
    %v458 = vmax.f32 %v456, %v457
    %v459 = vrot.slane %v458, 2
    %v460 = vmax.f32 %v458, %v459
    %v461 = vrot.slane %v460, 1
    %v462 = vmax.f32 %v460, %v461
    %v463 = vsel %vm452, %v438, -inf
    %v464 = vsel %vm454, %v439, -inf
    %v465 = vmax.f32 %v463, %v464
    %v466 = vrot.slane %v465, 4
    %v467 = vmax.f32 %v465, %v466
    %v468 = vrot.slane %v467, 2
    %v469 = vmax.f32 %v467, %v468
    %v470 = vrot.slane %v469, 1
    %v471 = vmax.f32 %v469, %v470
    %v472 = vsel %vm452, %v440, -inf
    %v473 = vsel %vm454, %v441, -inf
    %v474 = vmax.f32 %v472, %v473
    %v475 = vrot.slane %v474, 4
    %v476 = vmax.f32 %v474, %v475
    %v477 = vrot.slane %v476, 2
    %v478 = vmax.f32 %v476, %v477
    %v479 = vrot.slane %v478, 1
    %v480 = vmax.f32 %v478, %v479
    %v481 = vsel %vm452, %v442, -inf
    %v482 = vsel %vm454, %v443, -inf
    %v483 = vmax.f32 %v481, %v482
    %v484 = vrot.slane %v483, 4
    %v485 = vmax.f32 %v483, %v484
    %v486 = vrot.slane %v485, 2
    %v487 = vmax.f32 %v485, %v486
    %v488 = vrot.slane %v487, 1
    %v489 = vmax.f32 %v487, %v488
    %v490 = vsel %vm452, %v444, -inf
    %v491 = vsel %vm454, %v445, -inf
    %v492 = vmax.f32 %v490, %v491
    %v493 = vrot.slane %v492, 4
    %v494 = vmax.f32 %v492, %v493
    %v495 = vrot.slane %v494, 2
    %v496 = vmax.f32 %v494, %v495
    %v497 = vrot.slane %v496, 1
    %v498 = vmax.f32 %v496, %v497
    %v499 = vsel %vm452, %v446, -inf
    %v500 = vsel %vm454, %v447, -inf
    %v501 = vmax.f32 %v499, %v500
    %v502 = vrot.slane %v501, 4
    %v503 = vmax.f32 %v501, %v502
    %v504 = vrot.slane %v503, 2
    %v505 = vmax.f32 %v503, %v504
    %v506 = vrot.slane %v505, 1
    %v507 = vmax.f32 %v505, %v506
    %v508 = vsel %vm452, %v448, -inf
    %v509 = vsel %vm454, %v449, -inf
    %v510 = vmax.f32 %v508, %v509
    %v511 = vrot.slane %v510, 4
    %v512 = vmax.f32 %v510, %v511
    %v513 = vrot.slane %v512, 2
    %v514 = vmax.f32 %v512, %v513
    %v515 = vrot.slane %v514, 1
    %v516 = vmax.f32 %v514, %v515
    %v517 = vsel %vm452, %v450, -inf
    %v518 = vsel %vm454, %v451, -inf
    %v519 = vmax.f32 %v517, %v518
    %v520 = vrot.slane %v519, 4
    %v521 = vmax.f32 %v519, %v520
    %v522 = vrot.slane %v521, 2
    %v523 = vmax.f32 %v521, %v522
    %v524 = vrot.slane %v523, 1
    %v525 = vmax.f32 %v523, %v524
    %vm534 = vcmask 1041409
    %v535 = vsel %vm534, %v471, %v462
    %vm536 = vcmask 1042434
    %v537 = vsel %vm536, %v480, %v535
    %vm538 = vcmask 1043459
    %v539 = vsel %vm538, %v489, %v537
    %vm540 = vcmask 1044484
    %v541 = vsel %vm540, %v498, %v539
    %vm542 = vcmask 1045509
    %v543 = vsel %vm542, %v507, %v541
    %vm544 = vcmask 1046534
    %v545 = vsel %vm544, %v516, %v543
    %vm546 = vcmask 1047559
    %v547 = vsel %vm546, %v525, %v545
    %549 = vst.msk [vmem:[#allocation2] sm:$0xff] %vm452, %v547
    %vm550 = vcmask 1044480
    %v551 = vrot.slane %v195, 3
    %v552 = vrot.slane %v198, 3
    %v553 = vsel %vm550, %v551, %v552
    %v554 = vrot.slane %v203, 3
    %v555 = vrot.slane %v206, 3
    %v556 = vsel %vm550, %v554, %v555
    %v557 = vrot.slane %v211, 3
    %v558 = vrot.slane %v214, 3
    %v559 = vsel %vm550, %v557, %v558
    %v560 = vrot.slane %v219, 3
    %v561 = vrot.slane %v222, 3
    %v562 = vsel %vm550, %v560, %v561
    %v563 = vrot.slane %v227, 3
    %v564 = vrot.slane %v230, 3
    %v565 = vsel %vm550, %v563, %v564
    %v566 = vrot.slane %v235, 3
    %v567 = vrot.slane %v238, 3
    %v568 = vsel %vm550, %v566, %v567
    %v569 = vrot.slane %v243, 3
    %v570 = vrot.slane %v246, 3
    %v571 = vsel %vm550, %v569, %v570
    %v572 = vrot.slane %v251, 3
    %v573 = vrot.slane %v254, 3
    %v574 = vsel %vm550, %v572, %v573
    %575 = vrot.lane.b32.xlu0 %v553, 104
    %v576 = vpop.permute.xlu0 %575
    %577 = vrot.lane.b32.xlu0 %v552, 104
    %v578 = vpop.permute.xlu0 %577
    %579 = vrot.lane.b32.xlu0 %v556, 104
    %v580 = vpop.permute.xlu0 %579
    %581 = vrot.lane.b32.xlu0 %v555, 104
    %v582 = vpop.permute.xlu0 %581
    %583 = vrot.lane.b32.xlu0 %v559, 104
    %v584 = vpop.permute.xlu0 %583
    %585 = vrot.lane.b32.xlu0 %v558, 104
    %v586 = vpop.permute.xlu0 %585
    %587 = vrot.lane.b32.xlu0 %v562, 104
    %v588 = vpop.permute.xlu0 %587
    %589 = vrot.lane.b32.xlu0 %v561, 104
    %v590 = vpop.permute.xlu0 %589
    %591 = vrot.lane.b32.xlu0 %v565, 104
    %v592 = vpop.permute.xlu0 %591
    %593 = vrot.lane.b32.xlu0 %v564, 104
    %v594 = vpop.permute.xlu0 %593
    %595 = vrot.lane.b32.xlu0 %v568, 104
    %v596 = vpop.permute.xlu0 %595
    %597 = vrot.lane.b32.xlu0 %v567, 104
    %v598 = vpop.permute.xlu0 %597
    %599 = vrot.lane.b32.xlu0 %v571, 104
    %v600 = vpop.permute.xlu0 %599
    %601 = vrot.lane.b32.xlu0 %v570, 104
    %v602 = vpop.permute.xlu0 %601
    %603 = vrot.lane.b32.xlu0 %v574, 104
    %v604 = vpop.permute.xlu0 %603
    %605 = vrot.lane.b32.xlu0 %v573, 104
    %v606 = vpop.permute.xlu0 %605
    %v623 = vadd.f32 %v436, %v576
    %v624 = vadd.f32 %v437, %v578
    %v625 = vadd.f32 %v438, %v580
    %v626 = vadd.f32 %v439, %v582
    %v627 = vadd.f32 %v440, %v584
    %v628 = vadd.f32 %v441, %v586
    %v629 = vadd.f32 %v442, %v588
    %v630 = vadd.f32 %v443, %v590
    %v631 = vadd.f32 %v444, %v592
    %v632 = vadd.f32 %v445, %v594
    %v633 = vadd.f32 %v446, %v596
    %v634 = vadd.f32 %v447, %v598
    %v635 = vadd.f32 %v448, %v600
    %v636 = vadd.f32 %v449, %v602
    %v637 = vadd.f32 %v450, %v604
    %v638 = vadd.f32 %v451, %v606
    %vm639 = vcmask 261312
    %v640 = vsel %vm639, %v623, -inf
    %vm641 = vcmask 258240
    %v642 = vsel %vm641, %v624, -inf
    %v643 = vmax.f32 %v640, %v642
    %v644 = vrot.slane %v643, 4
    %v645 = vmax.f32 %v643, %v644
    %v646 = vrot.slane %v645, 2
    %v647 = vmax.f32 %v645, %v646
    %v648 = vrot.slane %v647, 1
    %v649 = vmax.f32 %v647, %v648
    %v650 = vsel %vm639, %v625, -inf
    %v651 = vsel %vm641, %v626, -inf
    %v652 = vmax.f32 %v650, %v651
    %v653 = vrot.slane %v652, 4
    %v654 = vmax.f32 %v652, %v653
    %v655 = vrot.slane %v654, 2
    %v656 = vmax.f32 %v654, %v655
    %v657 = vrot.slane %v656, 1
    %v658 = vmax.f32 %v656, %v657
    %v659 = vsel %vm639, %v627, -inf
    %v660 = vsel %vm641, %v628, -inf
    %v661 = vmax.f32 %v659, %v660
    %v662 = vrot.slane %v661, 4
    %v663 = vmax.f32 %v661, %v662
    %v664 = vrot.slane %v663, 2
    %v665 = vmax.f32 %v663, %v664
    %v666 = vrot.slane %v665, 1
    %v667 = vmax.f32 %v665, %v666
    %v668 = vsel %vm639, %v629, -inf
    %v669 = vsel %vm641, %v630, -inf
    %v670 = vmax.f32 %v668, %v669
    %v671 = vrot.slane %v670, 4
    %v672 = vmax.f32 %v670, %v671
    %v673 = vrot.slane %v672, 2
    %v674 = vmax.f32 %v672, %v673
    %v675 = vrot.slane %v674, 1
    %v676 = vmax.f32 %v674, %v675
    %v677 = vsel %vm639, %v631, -inf
    %v678 = vsel %vm641, %v632, -inf
    %v679 = vmax.f32 %v677, %v678
    %v680 = vrot.slane %v679, 4
    %v681 = vmax.f32 %v679, %v680
    %v682 = vrot.slane %v681, 2
    %v683 = vmax.f32 %v681, %v682
    %v684 = vrot.slane %v683, 1
    %v685 = vmax.f32 %v683, %v684
    %v686 = vsel %vm639, %v633, -inf
    %v687 = vsel %vm641, %v634, -inf
    %v688 = vmax.f32 %v686, %v687
    %v689 = vrot.slane %v688, 4
    %v690 = vmax.f32 %v688, %v689
    %v691 = vrot.slane %v690, 2
    %v692 = vmax.f32 %v690, %v691
    %v693 = vrot.slane %v692, 1
    %v694 = vmax.f32 %v692, %v693
    %v695 = vsel %vm639, %v635, -inf
    %v696 = vsel %vm641, %v636, -inf
    %v697 = vmax.f32 %v695, %v696
    %v698 = vrot.slane %v697, 4
    %v699 = vmax.f32 %v697, %v698
    %v700 = vrot.slane %v699, 2
    %v701 = vmax.f32 %v699, %v700
    %v702 = vrot.slane %v701, 1
    %v703 = vmax.f32 %v701, %v702
    %v704 = vsel %vm639, %v637, -inf
    %v705 = vsel %vm641, %v638, -inf
    %v706 = vmax.f32 %v704, %v705
    %v707 = vrot.slane %v706, 4
    %v708 = vmax.f32 %v706, %v707
    %v709 = vrot.slane %v708, 2
    %v710 = vmax.f32 %v708, %v709
    %v711 = vrot.slane %v710, 1
    %v712 = vmax.f32 %v710, %v711
    %v721 = vsel %vm534, %v658, %v649
    %v722 = vsel %vm536, %v667, %v721
    %v723 = vsel %vm538, %v676, %v722
    %v724 = vsel %vm540, %v685, %v723
    %v725 = vsel %vm542, %v694, %v724
    %v726 = vsel %vm544, %v703, %v725
    %v727 = vsel %vm546, %v712, %v726
    %728 = vrot.lane.b32.xlu0 %v727, 112
    %v729 = vpop.permute.xlu0 %728
    %vm731 = vcmask 130112
    %732 = vst.msk [vmem:[#allocation2] sm:$0xff] %vm731, %v729
    %vm733 = vcmask 1043456
    %v734 = vrot.slane %v195, 4
    %v735 = vrot.slane %v198, 4
    %v736 = vsel %vm733, %v734, %v735
    %v737 = vrot.slane %v203, 4
    %v738 = vrot.slane %v206, 4
    %v739 = vsel %vm733, %v737, %v738
    %v740 = vrot.slane %v211, 4
    %v741 = vrot.slane %v214, 4
    %v742 = vsel %vm733, %v740, %v741
    %v743 = vrot.slane %v219, 4
    %v744 = vrot.slane %v222, 4
    %v745 = vsel %vm733, %v743, %v744
    %v746 = vrot.slane %v227, 4
    %v747 = vrot.slane %v230, 4
    %v748 = vsel %vm733, %v746, %v747
    %v749 = vrot.slane %v235, 4
    %v750 = vrot.slane %v238, 4
    %v751 = vsel %vm733, %v749, %v750
    %v752 = vrot.slane %v243, 4
    %v753 = vrot.slane %v246, 4
    %v754 = vsel %vm733, %v752, %v753
    %v755 = vrot.slane %v251, 4
    %v756 = vrot.slane %v254, 4
    %v757 = vsel %vm733, %v755, %v756
    %758 = vrot.lane.b32.xlu0 %v736, 96
    %v759 = vpop.permute.xlu0 %758
    %760 = vrot.lane.b32.xlu0 %v735, 96
    %v761 = vpop.permute.xlu0 %760
    %762 = vrot.lane.b32.xlu0 %v739, 96
    %v763 = vpop.permute.xlu0 %762
    %764 = vrot.lane.b32.xlu0 %v738, 96
    %v765 = vpop.permute.xlu0 %764
    %766 = vrot.lane.b32.xlu0 %v742, 96
    %v767 = vpop.permute.xlu0 %766
    %768 = vrot.lane.b32.xlu0 %v741, 96
    %v769 = vpop.permute.xlu0 %768
    %770 = vrot.lane.b32.xlu0 %v745, 96
    %v771 = vpop.permute.xlu0 %770
    %772 = vrot.lane.b32.xlu0 %v744, 96
    %v773 = vpop.permute.xlu0 %772
    %774 = vrot.lane.b32.xlu0 %v748, 96
    %v775 = vpop.permute.xlu0 %774
    %776 = vrot.lane.b32.xlu0 %v747, 96
    %v777 = vpop.permute.xlu0 %776
    %778 = vrot.lane.b32.xlu0 %v751, 96
    %v779 = vpop.permute.xlu0 %778
    %780 = vrot.lane.b32.xlu0 %v750, 96
    %v781 = vpop.permute.xlu0 %780
    %782 = vrot.lane.b32.xlu0 %v754, 96
    %v783 = vpop.permute.xlu0 %782
    %784 = vrot.lane.b32.xlu0 %v753, 96
    %v785 = vpop.permute.xlu0 %784
    %786 = vrot.lane.b32.xlu0 %v757, 96
    %v787 = vpop.permute.xlu0 %786
    %788 = vrot.lane.b32.xlu0 %v756, 96
    %v789 = vpop.permute.xlu0 %788
    %v806 = vadd.f32 %v623, %v759
    %v807 = vadd.f32 %v624, %v761
    %v808 = vadd.f32 %v625, %v763
    %v809 = vadd.f32 %v626, %v765
    %v810 = vadd.f32 %v627, %v767
    %v811 = vadd.f32 %v628, %v769
    %v812 = vadd.f32 %v629, %v771
    %v813 = vadd.f32 %v630, %v773
    %v814 = vadd.f32 %v631, %v775
    %v815 = vadd.f32 %v632, %v777
    %v816 = vadd.f32 %v633, %v779
    %v817 = vadd.f32 %v634, %v781
    %v818 = vadd.f32 %v635, %v783
    %v819 = vadd.f32 %v636, %v785
    %v820 = vadd.f32 %v637, %v787
    %v821 = vadd.f32 %v638, %v789
    %vm822 = vcmask 523712
    %v823 = vsel %vm822, %v806, -inf
    %vm824 = vcmask 519616
    %v825 = vsel %vm824, %v807, -inf
    %v826 = vmax.f32 %v823, %v825
    %v827 = vrot.slane %v826, 4
    %v828 = vmax.f32 %v826, %v827
    %v829 = vrot.slane %v828, 2
    %v830 = vmax.f32 %v828, %v829
    %v831 = vrot.slane %v830, 1
    %v832 = vmax.f32 %v830, %v831
    %v833 = vsel %vm822, %v808, -inf
    %v834 = vsel %vm824, %v809, -inf
    %v835 = vmax.f32 %v833, %v834
    %v836 = vrot.slane %v835, 4
    %v837 = vmax.f32 %v835, %v836
    %v838 = vrot.slane %v837, 2
    %v839 = vmax.f32 %v837, %v838
    %v840 = vrot.slane %v839, 1
    %v841 = vmax.f32 %v839, %v840
    %v842 = vsel %vm822, %v810, -inf
    %v843 = vsel %vm824, %v811, -inf
    %v844 = vmax.f32 %v842, %v843
    %v845 = vrot.slane %v844, 4
    %v846 = vmax.f32 %v844, %v845
    %v847 = vrot.slane %v846, 2
    %v848 = vmax.f32 %v846, %v847
    %v849 = vrot.slane %v848, 1
    %v850 = vmax.f32 %v848, %v849
    %v851 = vsel %vm822, %v812, -inf
    %v852 = vsel %vm824, %v813, -inf
    %v853 = vmax.f32 %v851, %v852
    %v854 = vrot.slane %v853, 4
    %v855 = vmax.f32 %v853, %v854
    %v856 = vrot.slane %v855, 2
    %v857 = vmax.f32 %v855, %v856
    %v858 = vrot.slane %v857, 1
    %v859 = vmax.f32 %v857, %v858
    %v860 = vsel %vm822, %v814, -inf
    %v861 = vsel %vm824, %v815, -inf
    %v862 = vmax.f32 %v860, %v861
    %v863 = vrot.slane %v862, 4
    %v864 = vmax.f32 %v862, %v863
    %v865 = vrot.slane %v864, 2
    %v866 = vmax.f32 %v864, %v865
    %v867 = vrot.slane %v866, 1
    %v868 = vmax.f32 %v866, %v867
    %v869 = vsel %vm822, %v816, -inf
    %v870 = vsel %vm824, %v817, -inf
    %v871 = vmax.f32 %v869, %v870
    %v872 = vrot.slane %v871, 4
    %v873 = vmax.f32 %v871, %v872
    %v874 = vrot.slane %v873, 2
    %v875 = vmax.f32 %v873, %v874
    %v876 = vrot.slane %v875, 1
    %v877 = vmax.f32 %v875, %v876
    %v878 = vsel %vm822, %v818, -inf
    %v879 = vsel %vm824, %v819, -inf
    %v880 = vmax.f32 %v878, %v879
    %v881 = vrot.slane %v880, 4
    %v882 = vmax.f32 %v880, %v881
    %v883 = vrot.slane %v882, 2
    %v884 = vmax.f32 %v882, %v883
    %v885 = vrot.slane %v884, 1
    %v886 = vmax.f32 %v884, %v885
    %v887 = vsel %vm822, %v820, -inf
    %v888 = vsel %vm824, %v821, -inf
    %v889 = vmax.f32 %v887, %v888
    %v890 = vrot.slane %v889, 4
    %v891 = vmax.f32 %v889, %v890
    %v892 = vrot.slane %v891, 2
    %v893 = vmax.f32 %v891, %v892
    %v894 = vrot.slane %v893, 1
    %v895 = vmax.f32 %v893, %v894
    %v904 = vsel %vm534, %v841, %v832
    %v905 = vsel %vm536, %v850, %v904
    %v906 = vsel %vm538, %v859, %v905
    %v907 = vsel %vm540, %v868, %v906
    %v908 = vsel %vm542, %v877, %v907
    %v909 = vsel %vm544, %v886, %v908
    %v910 = vsel %vm546, %v895, %v909
    %911 = vrot.lane.b32.xlu0 %v910, 88
    %v912 = vpop.permute.xlu0 %911
    %vm914 = vcmask 195712
    %915 = vst.msk [vmem:[#allocation2] sm:$0xff] %vm914, %v912
    %v916 = vld [vmem:[#allocation2] sm:$0xff]
    %v917 = vld [vmem:[%s2] sm:$0x1]
    %v919 = vlaneseq
    %v920 = vshrl.u32 %v919, 7
    %v921 = vsub.s32 0, %v920
    %v922 = vrot.slane %v917, %v921
    %v924 = vadd.f32 %v916, %v922
    %v925 = vmax.f32 %v924, 0.0
    %v926 = vld [vmem:[#allocation8] sm:$0xff]
    %v927 = vld [vmem:[#allocation8 + $0x8] sm:$0xff]
    %v928 = vld [vmem:[#allocation8 + $0x10] sm:$0xff]
    %v929 = vld [vmem:[#allocation8 + $0x18] sm:$0xff]
    %v930 = vld [vmem:[#allocation8 + $0x20] sm:$0xff]
    %v931 = vld [vmem:[#allocation8 + $0x28] sm:$0xff]
    %v932 = vld [vmem:[#allocation8 + $0x30] sm:$0xff]
    %v933 = vld [vmem:[#allocation8 + $0x38] sm:$0xff]
    %v934 = vld [vmem:[#allocation8 + $0x40] sm:$0xff]
    %v935 = vld [vmem:[#allocation8 + $0x48] sm:$0xff]
    %v936 = vld [vmem:[#allocation8 + $0x50] sm:$0xff]
    %v937 = vld [vmem:[#allocation8 + $0x58] sm:$0xff]
    %v938 = vld [vmem:[#allocation8 + $0x60] sm:$0xff]
    %v939 = vld [vmem:[#allocation8 + $0x68] sm:$0xff]
    %v940 = vld [vmem:[#allocation8 + $0x70] sm:$0xff]
    %v941 = vld [vmem:[#allocation8 + $0x78] sm:$0xff]
    %v942 = vld [vmem:[%s4] sm:$0x1]
    %v944 = vlaneseq
    %v945 = vshrl.u32 %v944, 7
    %v946 = vsub.s32 0, %v945
    %v947 = vrot.slane %v942, %v946
    %949 = vmatprep.subr.mxu0 0.0
    %950 = vmatpush1.msra.mxu0 %v926
    %951 = vmatprep.subr.mxu0 0.0
    %952 = vmatpush1.msra.mxu0 %v927
    %953 = vmatprep.subr.mxu0 0.0
    %954 = vmatpush1.msra.mxu0 %v928
    %955 = vmatprep.subr.mxu0 0.0
    %956 = vmatpush1.msra.mxu0 %v929
    %957 = vmatprep.subr.mxu0 0.0
    %958 = vmatpush1.msra.mxu0 %v930
    %959 = vmatprep.subr.mxu0 0.0
    %960 = vmatpush1.msra.mxu0 %v931
    %961 = vmatprep.subr.mxu0 0.0
    %962 = vmatpush1.msra.mxu0 %v932
    %963 = vmatprep.subr.mxu0 0.0
    %964 = vmatpush1.msra.mxu0 %v933
    %965 = vmatprep.subr.mxu0 0.0
    %966 = vmatpush1.msra.mxu0 %v934
    %967 = vmatprep.subr.mxu0 0.0
    %968 = vmatpush1.msra.mxu0 %v935
    %969 = vmatprep.subr.mxu0 0.0
    %970 = vmatpush1.msra.mxu0 %v936
    %971 = vmatprep.subr.mxu0 0.0
    %972 = vmatpush1.msra.mxu0 %v937
    %973 = vmatprep.subr.mxu0 0.0
    %974 = vmatpush1.msra.mxu0 %v938
    %975 = vmatprep.subr.mxu0 0.0
    %976 = vmatpush1.msra.mxu0 %v939
    %977 = vmatprep.subr.mxu0 0.0
    %978 = vmatpush1.msra.mxu0 %v940
    %979 = vmatprep.subr.mxu0 0.0
    %980 = vmatpush1.msra.mxu0 %v941
    %981 = vmatprep.subr.mxu0 0.0
    %982 = vmatpush1.msra.mxu0 0.0
    %983 = vmatprep.subr.mxu0 0.0
    %984 = vmatpush1.msra.mxu0 0.0
    %985 = vmatprep.subr.mxu0 0.0
    %986 = vmatpush1.msra.mxu0 0.0
    %987 = vmatprep.subr.mxu0 0.0
    %988 = vmatpush1.msra.mxu0 0.0
    %989 = vmatprep.subr.mxu0 0.0
    %990 = vmatpush1.msra.mxu0 0.0
    %991 = vmatprep.subr.mxu0 0.0
    %992 = vmatpush1.msra.mxu0 0.0
    %993 = vmatprep.subr.mxu0 0.0
    %994 = vmatpush1.msra.mxu0 0.0
    %995 = vmatprep.subr.mxu0 0.0
    %996 = vmatpush1.msra.mxu0 0.0
    %997 = vmatprep.subr.mxu0 0.0
    %998 = vmatpush1.msra.mxu0 0.0
    %999 = vmatprep.subr.mxu0 0.0
    %1000 = vmatpush1.msra.mxu0 0.0
    %1001 = vmatprep.subr.mxu0 0.0
    %1002 = vmatpush1.msra.mxu0 0.0
    %1003 = vmatprep.subr.mxu0 0.0
    %1004 = vmatpush1.msra.mxu0 0.0
    %1005 = vmatprep.subr.mxu0 0.0
    %1006 = vmatpush1.msra.mxu0 0.0
    %1007 = vmatprep.subr.mxu0 0.0
    %1008 = vmatpush1.msra.mxu0 0.0
    %1009 = vmatprep.subr.mxu0 0.0
    %1010 = vmatpush1.msra.mxu0 0.0
    %1011 = vmatprep.subr.mxu0 0.0
    %1012 = vmatpush1.msra.mxu0 0.0
    %1013 = vmatprep.mubr.f32.mxu0 0.0
    %1014 = vmatmul.mubr.f32.gmra.mrb[0].mxu0 %v925
    %v1015 = vpop.f32.mrb[0].mxu0
    %v1016 = vadd.f32 %v947, %v1015
    %v1017 = vpop.f32.mrb[0].mxu0
    %1018 = vdwg.mxu0
    %1019 = vst [vmem:[#allocation9] sm:$0xff] %v1016
    // Predicated region
    $region34: #{tpu_custom_call.1} parent=1 // pred_check
      _
    $region35: #{tpu_custom_call.1} parent=1 // pred_check_branch
      %1021 = sbr.rel (0) target = $region37
    $region36: #{tpu_custom_call.1} parent=1 // pred_region
      %s1023 = ssub.s32 128, 128
      %1024 = vsyncadd [#allocation5], %s1023
      %s1026 = sshll.u32 [#allocation9], 4
      %s1027 = int_to_ptr.vmem [resolvable:$true] %s1026
      %1029 = dma.vmem_to_hbm [thread:$0]  %s1027, 128, %s5, [#allocation5]
    $region37: #{tpu_custom_call.1} parent=1 // pred_fallthru
      _
    // Predicated region
    $region38: #{tpu_custom_call.1} parent=1 // pred_check
      _
    $region39: #{tpu_custom_call.1} parent=1 // pred_check_branch
      %1031 = sbr.rel (0) target = $region41
    $region40: #{tpu_custom_call.1} parent=1 // pred_region
      %1032 = dma.done [#allocation5], 128
    $region41: #{tpu_custom_call.1} parent=1 // pred_fallthru
      _
    %1033 = vsyncpa [#allocation4], 1
    %1034 = vsyncpa [#allocation7], 1
    %1035 = vsyncpa [#allocation5], 1

</llo_original>
